<compile_context>
chip_gen: v7x
topology: tpu7x:2x2x1
jax: 0.10.0
libtpu: 0.0.40
codegen_flags: <defaults>
</compile_context>

<pallas_src>
import functools

import jax
import jax.numpy as jnp
from jax.experimental import pallas as pl
from jax.experimental.pallas import tpu as pltpu


def _round_up(v, m):
    return (v + m - 1) // m * m


def _vmem_budget_bytes():
    # ~3/4 of physical VMEM: ~96 MiB on v5e/v6e (128 MiB), ~48 MiB on v7x
    # (64 MiB).  Capped at 100 MiB; conservative (v7x-sized) fallback.
    try:
        cap = pltpu.get_tpu_info().vmem_capacity_bytes
    except Exception:
        cap = 64 * 1024 * 1024
    return int(min(cap * 3 // 4, 100 * 1024 * 1024))


def _lora_linear_kernel(*refs, use_lora, use_gating):
    """Fused LoRA-linear tile.

    Grid = (i: M tiles [parallel], j: N tiles, k: K tiles [reduction]).
    Scratch:
      acc_ref  (tm, tn)    f32  base-logit accumulator        (per i,j)
      gacc_ref (tm, tn)    f32  gate-logit accumulator        (per i,j)
      xa_ref   (tm, R_pad) f32  x @ A accumulator, computed only at j == 0
                                and reused for all j of the same i.
    """
    if use_lora and use_gating:
        (x_ref, w_ref, wg_ref, a_ref, b_ref, bg_ref, bp_ref,
         o_ref, acc_ref, gacc_ref, xa_ref) = refs
    elif use_lora:
        (x_ref, w_ref, a_ref, b_ref, bp_ref,
         o_ref, acc_ref, xa_ref) = refs
        wg_ref = bg_ref = gacc_ref = None
    else:
        (x_ref, w_ref, b_ref, o_ref, acc_ref) = refs
        wg_ref = bg_ref = a_ref = bp_ref = gacc_ref = xa_ref = None

    j = pl.program_id(1)
    k = pl.program_id(2)

    @pl.when(k == 0)
    def _init():
        acc_ref[...] = jnp.zeros_like(acc_ref)
        if use_gating:
            gacc_ref[...] = jnp.zeros_like(gacc_ref)

    if use_lora:
        @pl.when(jnp.logical_and(j == 0, k == 0))
        def _init_xa():
            xa_ref[...] = jnp.zeros_like(xa_ref)

    x_tile = x_ref[...]

    acc_ref[...] += jnp.dot(x_tile, w_ref[...],
                            preferred_element_type=jnp.float32)
    if use_gating:
        gacc_ref[...] += jnp.dot(x_tile, wg_ref[...],
                                 preferred_element_type=jnp.float32)
    if use_lora:
        # x @ A only once per M tile (at j == 0); reused for every N tile.
        @pl.when(j == 0)
        def _accum_xa():
            xa_ref[...] += jnp.dot(x_tile, a_ref[...],
                                   preferred_element_type=jnp.float32)

    @pl.when(k == pl.num_programs(2) - 1)
    def _finalize():
        out = acc_ref[...] + b_ref[...]
        if use_lora:
            lora = jnp.dot(xa_ref[...].astype(bp_ref.dtype), bp_ref[...],
                           preferred_element_type=jnp.float32)
            if use_gating:
                lora = lora * jax.nn.sigmoid(gacc_ref[...] + bg_ref[...])
            out = out + lora
        o_ref[...] = out.astype(o_ref.dtype)


def lora_linear(x, w, bias, lora_a=None, lora_b=None, gate_w=None, gate_b=None,
                *, lora_alpha=1, lora_rank=0, gating_function="identity",
                matmul_dtype=None, tm=None, tn=None, tk=None):
    """LoraLinear forward.

    x       : (..., in_features)
    w       : (out_features, in_features)        base linear weight
    bias    : (out_features,) or None
    lora_a  : (lora_rank, in_features)
    lora_b  : (out_features, lora_rank)
    gate_w  : (out_features, in_features)         (sigmoid gating only)
    gate_b  : (out_features,)                     (sigmoid gating only)
    matmul_dtype : optional MXU input dtype (e.g. jnp.bfloat16); accumulation
                   and the bias/sigmoid epilogue stay float32.
    """
    gating_function = gating_function.lower()
    use_lora = lora_rank > 0
    if use_lora and gating_function not in ("identity", "sigmoid"):
        raise ValueError(f"Unsupported gating_function: {gating_function}. "
                         "Supported: 'identity', 'sigmoid'.")
    use_gating = use_lora and gating_function == "sigmoid"
    if use_gating and (gate_w is None or gate_b is None):
        raise ValueError("sigmoid gating requires gate_w and gate_b")

    out_dtype = x.dtype
    *lead, K = x.shape
    N = w.shape[0]
    x2 = x.reshape(-1, K)
    M = x2.shape[0]

    cdt = jnp.dtype(matmul_dtype) if matmul_dtype is not None else jnp.dtype(out_dtype)
    itemsize = cdt.itemsize
    out_itemsize = jnp.dtype(out_dtype).itemsize
    pack = 32 // itemsize          # sublane pack: 8 f32 / 16 bf16 / 32 int8-fp8

    # ---- tile sizes: lane-dense (x128), sublane-packed, VMEM-budgeted ------
    if tm is None:
        tm = 512
    if tn is None:
        tn = 512
    if tk is None:
        tk = 512 if itemsize >= 4 else 1024

    tm_eff = _round_up(min(tm, _round_up(M, pack)), pack)
    tn_eff = _round_up(min(tn, _round_up(N, 128)), 128)
    tk_eff = _round_up(min(tk, _round_up(K, 128)), 128)
    R_pad = _round_up(lora_rank, 128) if use_lora else 0

    budget = _vmem_budget_bytes()

    def _footprint(tm_, tn_, tk_):
        per_step = (tm_ * tk_ + tk_ * tn_ * (2 if use_gating else 1)) * itemsize
        if use_lora:
            per_step += (tk_ * R_pad + R_pad * tn_) * itemsize
        per_step += tn_ * 4 * (2 if use_gating else 1)           # biases (f32)
        per_step += tm_ * tn_ * out_itemsize                     # output tile
        total = 2 * per_step                                     # double buffering
        total += tm_ * tn_ * 4 * (2 if use_gating else 1)        # acc (+gacc)
        if use_lora:
            total += tm_ * R_pad * 4                             # xa scratch
        return total

    while _footprint(tm_eff, tn_eff, tk_eff) > budget and tk_eff > 128:
        tk_eff = max(128, _round_up(tk_eff // 2, 128))
    while _footprint(tm_eff, tn_eff, tk_eff) > budget and tn_eff > 128:
        tn_eff = max(128, _round_up(tn_eff // 2, 128))
    while _footprint(tm_eff, tn_eff, tk_eff) > budget and tm_eff > pack:
        tm_eff = max(pack, _round_up(tm_eff // 2, pack))

    M_pad = _round_up(M, tm_eff)
    N_pad = _round_up(N, tn_eff)
    K_pad = _round_up(K, tk_eff)
    m_tiles = M_pad // tm_eff
    n_tiles = N_pad // tn_eff
    k_tiles = K_pad // tk_eff

    # ---- padded operands (in real use: prep weights once, not per call) ----
    def pad2(a, rows, cols):
        r, c = a.shape
        return jnp.pad(a, ((0, rows - r), (0, cols - c)))

    x_p = pad2(x2.astype(cdt), M_pad, K_pad)
    w_t = pad2(w.T.astype(cdt), K_pad, N_pad)                    # (K_pad, N_pad)
    if bias is None:
        bias = jnp.zeros((N,), jnp.float32)
    bias_p = jnp.pad(bias.astype(jnp.float32), (0, N_pad - N)).reshape(1, N_pad)

    if use_lora:
        scaling = lora_alpha / lora_rank
        a_p = pad2(lora_a.T.astype(cdt), K_pad, R_pad)           # (K_pad, R_pad)
        b_p = pad2((lora_b * scaling).T.astype(cdt), R_pad, N_pad)  # scale folded
    if use_gating:
        wg_t = pad2(gate_w.T.astype(cdt), K_pad, N_pad)
        gbias_p = jnp.pad(gate_b.astype(jnp.float32),
                          (0, N_pad - N)).reshape(1, N_pad)

    # ---- BlockSpecs ---------------------------------------------------------
    # Deep-buffer the big streamed weight tiles for decode-style shapes where
    # per-step MXU work is too small to hide the weight DMA.
    use_deep_buffer = (m_tiles == 1 and tm_eff <= 128 and n_tiles * k_tiles >= 4)

    def weight_spec(shape, index_map):
        if use_deep_buffer:
            try:
                return pl.BlockSpec(shape, index_map,
                                    pipeline_mode=pl.Buffered(3))
            except (TypeError, AttributeError):
                pass
        return pl.BlockSpec(shape, index_map)

    x_spec = pl.BlockSpec((tm_eff, tk_eff), lambda i, j, k: (i, k))
    w_spec = weight_spec((tk_eff, tn_eff), lambda i, j, k: (k, j))
    b_spec = pl.BlockSpec((1, tn_eff), lambda i, j, k: (0, j))
    o_spec = pl.BlockSpec((tm_eff, tn_eff), lambda i, j, k: (i, j))

    in_specs = [x_spec, w_spec]
    operands = [x_p, w_t]
    if use_gating:
        in_specs.append(weight_spec((tk_eff, tn_eff), lambda i, j, k: (k, j)))
        operands.append(wg_t)
    if use_lora:
        # Only streamed while j == 0 (block index frozen at (0,0) afterwards,
        # so the pipeline skips re-fetching it for j > 0).
        in_specs.append(pl.BlockSpec(
            (tk_eff, R_pad), lambda i, j, k: (jnp.where(j == 0, k, 0), 0)))
        operands.append(a_p)
    in_specs.append(b_spec)
    operands.append(bias_p)
    if use_gating:
        in_specs.append(b_spec)
        operands.append(gbias_p)
    if use_lora:
        in_specs.append(pl.BlockSpec((R_pad, tn_eff), lambda i, j, k: (0, j)))
        operands.append(b_p)

    scratch_shapes = [pltpu.VMEM((tm_eff, tn_eff), jnp.float32)]      # acc
    if use_gating:
        scratch_shapes.append(pltpu.VMEM((tm_eff, tn_eff), jnp.float32))  # gacc
    if use_lora:
        scratch_shapes.append(pltpu.VMEM((tm_eff, R_pad), jnp.float32))   # xa

    # j must be 'arbitrary' when the x@A scratch carries across N tiles;
    # M stays 'parallel' so megacore (v7x) still shards the batch axis.
    if use_lora:
        dims = ("parallel", "arbitrary", "arbitrary")
    else:
        dims = ("parallel", "parallel", "arbitrary")

    # ---- cost estimate (advisory): reflect actual re-streaming -------------
    flops = 2 * M_pad * K_pad * N_pad
    if use_gating:
        flops += 2 * M_pad * K_pad * N_pad
    if use_lora:
        flops += 2 * M_pad * K_pad * R_pad + 2 * M_pad * R_pad * N_pad
    bytes_accessed = (M_pad * K_pad * itemsize * n_tiles            # x per N tile
                      + K_pad * N_pad * itemsize * m_tiles * (2 if use_gating else 1)
                      + ((K_pad * R_pad + R_pad * N_pad) * itemsize * m_tiles
                         if use_lora else 0)
                      + N_pad * 4 * (2 if use_gating else 1) * m_tiles
                      + M_pad * N_pad * out_itemsize)
    cost = pl.CostEstimate(flops=int(flops),
                           transcendentals=int(M_pad * N_pad) if use_gating else 0,
                           bytes_accessed=int(bytes_accessed))

    kernel = functools.partial(_lora_linear_kernel,
                               use_lora=use_lora, use_gating=use_gating)

    out_p = pl.pallas_call(
        kernel,
        out_shape=jax.ShapeDtypeStruct((M_pad, N_pad), out_dtype),
        grid_spec=pltpu.PrefetchScalarGridSpec(
            num_scalar_prefetch=0,
            grid=(m_tiles, n_tiles, k_tiles),
            in_specs=in_specs,
            out_specs=o_spec,
            scratch_shapes=scratch_shapes),
        compiler_params=pltpu.CompilerParams(
            dimension_semantics=dims,
            vmem_limit_bytes=budget),
        cost_estimate=cost,
    )(*operands)

    out = out_p[:M, :N]
    return out.reshape(*lead, N)


def _reference(x, w, bias, lora_a, lora_b, gate_w, gate_b, *,
               lora_alpha, lora_rank, gating_function):
    lead = x.shape[:-1]
    x2 = x.reshape(-1, x.shape[-1])
    out = x2 @ w.T + (bias if bias is not None else 0.0)
    if lora_rank > 0:
        scaling = lora_alpha / lora_rank
        lora = (x2 @ lora_a.T) @ lora_b.T * scaling
        if gating_function == "sigmoid":
            lora = lora * jax.nn.sigmoid(x2 @ gate_w.T + gate_b)
        out = out + lora
    return out.reshape(*lead, w.shape[0])


if __name__ == "__main__":
    key = jax.random.PRNGKey(0)

    def make_params(k, in_f, out_f, rank):
        kw, kb, ka, kbm, kwg, kbg = jax.random.split(k, 6)
        w = jax.random.normal(kw, (out_f, in_f), jnp.float32) * 0.1
        bias = jax.random.normal(kb, (out_f,), jnp.float32) * 0.1
        la = jax.random.normal(ka, (rank, in_f), jnp.float32) * 0.1
        lb = jax.random.normal(kbm, (out_f, rank), jnp.float32) * 0.1
        gw = jax.random.normal(kwg, (out_f, in_f), jnp.float32) * 0.1
        gb = jax.random.normal(kbg, (out_f,), jnp.float32) * 0.1
        return w, bias, la, lb, gw, gb

    k0, k1, k2, k3 = jax.random.split(key, 4)

    # ---- Small module-like shape: batch=2, seq=8, in=32, out=32, rank=8 ----
    in_f, out_f, rank, alpha = 32, 32, 8, 16
    x = jax.random.normal(k0, (2, 8, in_f), jnp.float32)
    w, bias, la, lb, gw, gb = make_params(k1, in_f, out_f, rank)

    out_sig = lora_linear(x, w, bias, la, lb, gw, gb, lora_alpha=alpha,
                          lora_rank=rank, gating_function="sigmoid")
    jax.block_until_ready(out_sig)
    ref_sig = _reference(x, w, bias, la, lb, gw, gb, lora_alpha=alpha,
                         lora_rank=rank, gating_function="sigmoid")
    assert out_sig.shape == ref_sig.shape
    assert jnp.allclose(out_sig, ref_sig, rtol=2e-4, atol=2e-4), \
        "sigmoid-gated mismatch vs reference (small)"

    out_id = lora_linear(x, w, bias, la, lb, lora_alpha=alpha,
                         lora_rank=rank, gating_function="identity")
    jax.block_until_ready(out_id)
    ref_id = _reference(x, w, bias, la, lb, None, None, lora_alpha=alpha,
                        lora_rank=rank, gating_function="identity")
    assert jnp.allclose(out_id, ref_id, rtol=2e-4, atol=2e-4), \
        "identity-gated mismatch vs reference (small)"

    out_base = lora_linear(x, w, bias, lora_rank=0)
    jax.block_until_ready(out_base)
    ref_base = _reference(x, w, bias, None, None, None, None, lora_alpha=1,
                          lora_rank=0, gating_function="identity")
    assert jnp.allclose(out_base, ref_base, rtol=2e-4, atol=2e-4), \
        "plain-linear (rank 0) mismatch vs reference"

    # ---- Multi-tile shape: exercises K-accumulation, j-carried x@A reuse,
    # N/K zero padding and gating across several grid steps ----
    in_f2, out_f2, rank2, alpha2 = 640, 640, 8, 16
    xb = jax.random.normal(k2, (2, 128, in_f2), jnp.float32)
    w2, b2, la2, lb2, gw2, gb2 = make_params(k3, in_f2, out_f2, rank2)

    out_big = lora_linear(xb, w2, b2, la2, lb2, gw2, gb2, lora_alpha=alpha2,
                          lora_rank=rank2, gating_function="sigmoid")
    jax.block_until_ready(out_big)
    ref_big = _reference(xb, w2, b2, la2, lb2, gw2, gb2, lora_alpha=alpha2,
                         lora_rank=rank2, gating_function="sigmoid")
    assert jnp.allclose(out_big, ref_big, rtol=5e-3, atol=5e-3), \
        "sigmoid-gated mismatch vs reference (multi-tile)"

    # ---- bf16 MXU-input path (f32 accumulation / epilogue), loose check ----
    out_bf16 = lora_linear(x, w, bias, la, lb, gw, gb, lora_alpha=alpha,
                           lora_rank=rank, gating_function="sigmoid",
                           matmul_dtype=jnp.bfloat16)
    jax.block_until_ready(out_bf16)
    assert jnp.allclose(out_bf16, ref_sig, rtol=5e-2, atol=5e-2), \
        "bf16-MXU path mismatch vs f32 reference"

    print("KERNEL_OK")
</pallas_src>

<mosaic_0001>
module attributes {stable_mosaic.version = 11 : i64} {
  func.func @_lora_linear_kernel(%arg0: i32, %arg1: i32, %arg2: i32, %arg3: memref<16x128xf32, #tpu.memory_space<vmem>>, %arg4: memref<128x128xf32, #tpu.memory_space<vmem>>, %arg5: memref<128x128xf32, #tpu.memory_space<vmem>>, %arg6: memref<128x128xf32, #tpu.memory_space<vmem>>, %arg7: memref<1x128xf32, #tpu.memory_space<vmem>>, %arg8: memref<1x128xf32, #tpu.memory_space<vmem>>, %arg9: memref<128x128xf32, #tpu.memory_space<vmem>>, %arg10: memref<16x128xf32, #tpu.memory_space<vmem>>, %arg11: memref<16x128xf32, #tpu.memory_space<vmem>>, %arg12: memref<16x128xf32, #tpu.memory_space<vmem>>, %arg13: memref<16x128xf32, #tpu.memory_space<vmem>>) attributes {dimension_semantics = [#tpu.dimension_semantics<parallel>, #tpu.dimension_semantics<arbitrary>, #tpu.dimension_semantics<arbitrary>], iteration_bounds = array<i64: 1, 1, 1>, scalar_prefetch = 0 : i64, scratch_operands = 3 : i64, tpu.core_type = #tpu.core_type<tc>, window_params = [{transform_indices = @transform_0, window_bounds = array<i64: 16, 128>}, {transform_indices = @transform_1, window_bounds = array<i64: 128, 128>}, {transform_indices = @transform_2, window_bounds = array<i64: 128, 128>}, {transform_indices = @transform_3, window_bounds = array<i64: 128, 128>}, {transform_indices = @transform_4, window_bounds = array<i64: 1, 128>}, {transform_indices = @transform_5, window_bounds = array<i64: 1, 128>}, {transform_indices = @transform_6, window_bounds = array<i64: 128, 128>}, {transform_indices = @transform_7, window_bounds = array<i64: 16, 128>}]} {
    %c0_i32 = arith.constant 0 : i32
    %0 = arith.cmpi eq, %arg2, %c0_i32 : i32
    %1 = arith.extui %0 : i1 to i32
    %c0_i32_0 = arith.constant 0 : i32
    %2 = arith.cmpi ne, %1, %c0_i32_0 : i32
    scf.if %2 {
      %cst_22 = arith.constant 0.000000e+00 : f32
      %25 = vector.broadcast %cst_22 : f32 to vector<16x128xf32>
      %c0_23 = arith.constant 0 : index
      %c0_24 = arith.constant 0 : index
      %26 = vector.load %arg11[%c0_23, %c0_24] : memref<16x128xf32, #tpu.memory_space<vmem>>, vector<16x128xf32>
      tpu.vector_store %arg11[%c0_23, %c0_24], %25 {strides = array<i32>} : memref<16x128xf32, #tpu.memory_space<vmem>>, vector<16x128xf32>,
      %cst_25 = arith.constant 0.000000e+00 : f32
      %27 = vector.broadcast %cst_25 : f32 to vector<16x128xf32>
      %c0_26 = arith.constant 0 : index
      %c0_27 = arith.constant 0 : index
      %28 = vector.load %arg12[%c0_26, %c0_27] : memref<16x128xf32, #tpu.memory_space<vmem>>, vector<16x128xf32>
      tpu.vector_store %arg12[%c0_26, %c0_27], %27 {strides = array<i32>} : memref<16x128xf32, #tpu.memory_space<vmem>>, vector<16x128xf32>,
    } else {
    }
    %c0_i32_1 = arith.constant 0 : i32
    %3 = arith.cmpi eq, %arg1, %c0_i32_1 : i32
    %c0_i32_2 = arith.constant 0 : i32
    %4 = arith.cmpi eq, %arg2, %c0_i32_2 : i32
    %5 = arith.andi %3, %4 : i1
    %6 = arith.extui %5 : i1 to i32
    %c0_i32_3 = arith.constant 0 : i32
    %7 = arith.cmpi ne, %6, %c0_i32_3 : i32
    scf.if %7 {
      %cst_22 = arith.constant 0.000000e+00 : f32
      %25 = vector.broadcast %cst_22 : f32 to vector<16x128xf32>
      %c0_23 = arith.constant 0 : index
      %c0_24 = arith.constant 0 : index
      %26 = vector.load %arg13[%c0_23, %c0_24] : memref<16x128xf32, #tpu.memory_space<vmem>>, vector<16x128xf32>
      tpu.vector_store %arg13[%c0_23, %c0_24], %25 {strides = array<i32>} : memref<16x128xf32, #tpu.memory_space<vmem>>, vector<16x128xf32>,
    } else {
    }
    %c0 = arith.constant 0 : index
    %c0_4 = arith.constant 0 : index
    %8 = vector.load %arg3[%c0, %c0_4] : memref<16x128xf32, #tpu.memory_space<vmem>>, vector<16x128xf32>
    %c0_5 = arith.constant 0 : index
    %c0_6 = arith.constant 0 : index
    %9 = vector.load %arg11[%c0_5, %c0_6] : memref<16x128xf32, #tpu.memory_space<vmem>>, vector<16x128xf32>
    %c0_7 = arith.constant 0 : index
    %c0_8 = arith.constant 0 : index
    %10 = vector.load %arg4[%c0_7, %c0_8] : memref<128x128xf32, #tpu.memory_space<vmem>>, vector<128x128xf32>
    %cst = arith.constant dense<0.000000e+00> : vector<16x128xf32>
    %11 = tpu.matmul %8, %10, %cst {dimension_numbers = #tpu.dot_dimension_numbers<[1], [0], [0], [1], [0, 0, 1, 1], [], []>} : vector<16x128xf32>, vector<128x128xf32>, vector<16x128xf32> -> vector<16x128xf32>
    %12 = arith.addf %9, %11 : vector<16x128xf32>
    %c0_9 = arith.constant 0 : index
    %c0_10 = arith.constant 0 : index
    %13 = vector.load %arg11[%c0_9, %c0_10] : memref<16x128xf32, #tpu.memory_space<vmem>>, vector<16x128xf32>
    tpu.vector_store %arg11[%c0_9, %c0_10], %12 {strides = array<i32>} : memref<16x128xf32, #tpu.memory_space<vmem>>, vector<16x128xf32>,
    %c0_11 = arith.constant 0 : index
    %c0_12 = arith.constant 0 : index
    %14 = vector.load %arg12[%c0_11, %c0_12] : memref<16x128xf32, #tpu.memory_space<vmem>>, vector<16x128xf32>
    %c0_13 = arith.constant 0 : index
    %c0_14 = arith.constant 0 : index
    %15 = vector.load %arg5[%c0_13, %c0_14] : memref<128x128xf32, #tpu.memory_space<vmem>>, vector<128x128xf32>
    %cst_15 = arith.constant dense<0.000000e+00> : vector<16x128xf32>
    %16 = tpu.matmul %8, %15, %cst_15 {dimension_numbers = #tpu.dot_dimension_numbers<[1], [0], [0], [1], [0, 0, 1, 1], [], []>} : vector<16x128xf32>, vector<128x128xf32>, vector<16x128xf32> -> vector<16x128xf32>
    %17 = arith.addf %14, %16 : vector<16x128xf32>
    %c0_16 = arith.constant 0 : index
    %c0_17 = arith.constant 0 : index
    %18 = vector.load %arg12[%c0_16, %c0_17] : memref<16x128xf32, #tpu.memory_space<vmem>>, vector<16x128xf32>
    tpu.vector_store %arg12[%c0_16, %c0_17], %17 {strides = array<i32>} : memref<16x128xf32, #tpu.memory_space<vmem>>, vector<16x128xf32>,
    %c0_i32_18 = arith.constant 0 : i32
    %19 = arith.cmpi eq, %arg1, %c0_i32_18 : i32
    %20 = arith.extui %19 : i1 to i32
    %c0_i32_19 = arith.constant 0 : i32
    %21 = arith.cmpi ne, %20, %c0_i32_19 : i32
    scf.if %21 {
      %c0_22 = arith.constant 0 : index
      %c0_23 = arith.constant 0 : index
      %25 = vector.load %arg13[%c0_22, %c0_23] : memref<16x128xf32, #tpu.memory_space<vmem>>, vector<16x128xf32>
      %c0_24 = arith.constant 0 : index
      %c0_25 = arith.constant 0 : index
      %26 = vector.load %arg6[%c0_24, %c0_25] : memref<128x128xf32, #tpu.memory_space<vmem>>, vector<128x128xf32>
      %cst_26 = arith.constant dense<0.000000e+00> : vector<16x128xf32>
      %27 = tpu.matmul %8, %26, %cst_26 {dimension_numbers = #tpu.dot_dimension_numbers<[1], [0], [0], [1], [0, 0, 1, 1], [], []>} : vector<16x128xf32>, vector<128x128xf32>, vector<16x128xf32> -> vector<16x128xf32>
      %28 = arith.addf %25, %27 : vector<16x128xf32>
      %c0_27 = arith.constant 0 : index
      %c0_28 = arith.constant 0 : index
      %29 = vector.load %arg13[%c0_27, %c0_28] : memref<16x128xf32, #tpu.memory_space<vmem>>, vector<16x128xf32>
      tpu.vector_store %arg13[%c0_27, %c0_28], %28 {strides = array<i32>} : memref<16x128xf32, #tpu.memory_space<vmem>>, vector<16x128xf32>,
    } else {
    }
    %c0_i32_20 = arith.constant 0 : i32
    %22 = arith.cmpi eq, %arg2, %c0_i32_20 : i32
    %23 = arith.extui %22 : i1 to i32
    %c0_i32_21 = arith.constant 0 : i32
    %24 = arith.cmpi ne, %23, %c0_i32_21 : i32
    scf.if %24 {
      %c0_22 = arith.constant 0 : index
      %c0_23 = arith.constant 0 : index
      %25 = vector.load %arg11[%c0_22, %c0_23] : memref<16x128xf32, #tpu.memory_space<vmem>>, vector<16x128xf32>
      %c0_24 = arith.constant 0 : index
      %c0_25 = arith.constant 0 : index
      %26 = vector.load %arg7[%c0_24, %c0_25] : memref<1x128xf32, #tpu.memory_space<vmem>>, vector<1x128xf32>
      %27 = vector.broadcast %26 : vector<1x128xf32> to vector<16x128xf32>
      %28 = arith.addf %25, %27 : vector<16x128xf32>
      %c0_26 = arith.constant 0 : index
      %c0_27 = arith.constant 0 : index
      %29 = vector.load %arg13[%c0_26, %c0_27] : memref<16x128xf32, #tpu.memory_space<vmem>>, vector<16x128xf32>
      %c0_28 = arith.constant 0 : index
      %c0_29 = arith.constant 0 : index
      %30 = vector.load %arg9[%c0_28, %c0_29] : memref<128x128xf32, #tpu.memory_space<vmem>>, vector<128x128xf32>
      %cst_30 = arith.constant dense<0.000000e+00> : vector<16x128xf32>
      %31 = tpu.matmul %29, %30, %cst_30 {dimension_numbers = #tpu.dot_dimension_numbers<[1], [0], [0], [1], [0, 0, 1, 1], [], []>} : vector<16x128xf32>, vector<128x128xf32>, vector<16x128xf32> -> vector<16x128xf32>
      %c0_31 = arith.constant 0 : index
      %c0_32 = arith.constant 0 : index
      %32 = vector.load %arg12[%c0_31, %c0_32] : memref<16x128xf32, #tpu.memory_space<vmem>>, vector<16x128xf32>
      %c0_33 = arith.constant 0 : index
      %c0_34 = arith.constant 0 : index
      %33 = vector.load %arg8[%c0_33, %c0_34] : memref<1x128xf32, #tpu.memory_space<vmem>>, vector<1x128xf32>
      %34 = vector.broadcast %33 : vector<1x128xf32> to vector<16x128xf32>
      %35 = arith.addf %32, %34 : vector<16x128xf32>
      %36 = arith.negf %35 : vector<16x128xf32>
      %37 = math.exp %36 : vector<16x128xf32>
      %cst_35 = arith.constant 1.000000e+00 : f32
      %38 = vector.broadcast %cst_35 : f32 to vector<16x128xf32>
      %39 = arith.addf %38, %37 : vector<16x128xf32>
      %40 = arith.divf %38, %39 : vector<16x128xf32>
      %41 = arith.mulf %31, %40 : vector<16x128xf32>
      %42 = arith.addf %28, %41 : vector<16x128xf32>
      %c0_36 = arith.constant 0 : index
      %c0_37 = arith.constant 0 : index
      %43 = vector.load %arg10[%c0_36, %c0_37] : memref<16x128xf32, #tpu.memory_space<vmem>>, vector<16x128xf32>
      tpu.vector_store %arg10[%c0_36, %c0_37], %42 {strides = array<i32>} : memref<16x128xf32, #tpu.memory_space<vmem>>, vector<16x128xf32>,
    } else {
    }
    return
  }
  func.func @transform_0(%arg0: i32, %arg1: i32, %arg2: i32) -> (i32, i32) {
    %c0_i32 = arith.constant 0 : i32
    return %arg0, %arg2 : i32, i32
  }
  func.func @transform_1(%arg0: i32, %arg1: i32, %arg2: i32) -> (i32, i32) {
    %c0_i32 = arith.constant 0 : i32
    return %arg2, %arg1 : i32, i32
  }
  func.func @transform_2(%arg0: i32, %arg1: i32, %arg2: i32) -> (i32, i32) {
    %c0_i32 = arith.constant 0 : i32
    return %arg2, %arg1 : i32, i32
  }
  func.func @transform_3(%arg0: i32, %arg1: i32, %arg2: i32) -> (i32, i32) {
    %c0_i32 = arith.constant 0 : i32
    %0 = arith.cmpi eq, %arg1, %c0_i32 : i32
    %c0_i32_0 = arith.constant 0 : i32
    %1 = arith.select %0, %arg2, %c0_i32_0 : i32
    %c0_i32_1 = arith.constant 0 : i32
    %c0_i32_2 = arith.constant 0 : i32
    return %1, %c0_i32_1 : i32, i32
  }
  func.func @transform_4(%arg0: i32, %arg1: i32, %arg2: i32) -> (i32, i32) {
    %c0_i32 = arith.constant 0 : i32
    %c0_i32_0 = arith.constant 0 : i32
    return %c0_i32, %arg1 : i32, i32
  }
  func.func @transform_5(%arg0: i32, %arg1: i32, %arg2: i32) -> (i32, i32) {
    %c0_i32 = arith.constant 0 : i32
    %c0_i32_0 = arith.constant 0 : i32
    return %c0_i32, %arg1 : i32, i32
  }
  func.func @transform_6(%arg0: i32, %arg1: i32, %arg2: i32) -> (i32, i32) {
    %c0_i32 = arith.constant 0 : i32
    %c0_i32_0 = arith.constant 0 : i32
    return %c0_i32, %arg1 : i32, i32
  }
  func.func @transform_7(%arg0: i32, %arg1: i32, %arg2: i32) -> (i32, i32) {
    %c0_i32 = arith.constant 0 : i32
    return %arg0, %arg1 : i32, i32
  }
}

</mosaic_0001>

<llo_original>
// kernel: tpu_custom_call.1
$region0: #{tpu_custom_call.1}
  #allocation0 [shape = 'u32[]', space=smem, size = 0x4, offset = 0x4, fixed_abs, tag = 'smem constant byte address 0x4 - core index']
  #allocation1 [shape = 'u32[144,128]{1,0:T(1,128)}', space=vmem, size = 0x12000, scoped, tag = 'internal scratch']
  #allocation2 [shape = 'f32[16,128]{1,0:T(8,128)}', space=vmem, size = 0x2000, scoped, tag = 'scratch operand']
  #allocation3 [shape = 'f32[16,128]{1,0:T(8,128)}', space=vmem, size = 0x2000, scoped, tag = 'scratch operand']
  #allocation4 [shape = 'f32[16,128]{1,0:T(8,128)}', space=vmem, size = 0x2000, scoped, tag = 'scratch operand']
  %s0 = inlined_call_operand.hbm [shape: f32[16,128], index: 0, kind: input, shape index: {}]
  %s1 = inlined_call_operand.hbm [shape: f32[128,128], index: 1, kind: input, shape index: {}]
  %s2 = inlined_call_operand.hbm [shape: f32[128,128], index: 2, kind: input, shape index: {}]
  %s3 = inlined_call_operand.hbm [shape: f32[128,128], index: 3, kind: input, shape index: {}]
  %s4 = inlined_call_operand.vmem [shape: f32[1,128], index: 4, kind: input, shape index: {}]
  %s5 = inlined_call_operand.vmem [shape: f32[1,128], index: 5, kind: input, shape index: {}]
  %s6 = inlined_call_operand.hbm [shape: f32[128,128], index: 6, kind: input, shape index: {}]
  %s7 = inlined_call_operand.hbm [shape: f32[16,128], index: 7, kind: output, shape index: {}]
  %s8 = sld [smem:[#allocation0]]
  $region74: #{tpu_custom_call.1} parent=0
    _
  %s10 = ssub.s32 1, %s8
  %s11 = scalar_select 0, %s10, %s8
  $region1: #{tpu_custom_call.1} parent=0
    #allocation5 [shape = 'u8[8192]{0}', space=vmem, size = 0x2000, scoped, tag = 'input window, operand 0, single buffered']
    #allocation6 [shape = 's32[1]{0}', space=sflag, size = 0x4, scoped, tag = 'scoped memory for tpu_custom_call.1']
    #allocation7 [shape = 's32[1]{0}', space=sflag, size = 0x4, scoped, tag = 'scoped memory for tpu_custom_call.1']
    #allocation8 [shape = 'u8[65536]{0}', space=vmem, size = 0x10000, scoped, tag = 'input window, operand 1, single buffered']
    #allocation9 [shape = 's32[1]{0}', space=sflag, size = 0x4, scoped, tag = 'scoped memory for tpu_custom_call.1']
    #allocation10 [shape = 'u8[65536]{0}', space=vmem, size = 0x10000, scoped, tag = 'input window, operand 2, single buffered']
    #allocation11 [shape = 'u8[65536]{0}', space=vmem, size = 0x10000, scoped, tag = 'input window, operand 3, single buffered']
    #allocation12 [shape = 's32[1]{0}', space=sflag, size = 0x4, scoped, tag = 'scoped memory for tpu_custom_call.1']
    #allocation13 [shape = 'u8[65536]{0}', space=vmem, size = 0x10000, scoped, tag = 'input window, operand 6, single buffered']
    #allocation14 [shape = 'u8[8192]{0}', space=vmem, size = 0x2000, scoped, tag = 'output window, operand 0, single buffered']
    %12 = vsyncpa [#allocation6], 0
    %13 = vsyncpa [#allocation9], 0
    %14 = vsyncpa [#allocation12], 0
    %15 = vsyncpa [#allocation7], 0
    // Predicated region
    $region2: #{tpu_custom_call.1} parent=1 // pred_check
      _
    $region3: #{tpu_custom_call.1} parent=1 // pred_check_branch
      %17 = sbr.rel (0) target = $region5
    $region4: #{tpu_custom_call.1} parent=1 // pred_region
      %s19 = ssub.s32 256, 256
      %20 = vsyncadd [#allocation6], %s19
      %s21 = sshll.u32 [#allocation5], 4
      %s22 = int_to_ptr.vmem [resolvable:$true] %s21
      %27 = dma.hbm_to_vmem [thread:$0]  %s0, 256, %s22, [#allocation6], 128, 128, 8
    $region5: #{tpu_custom_call.1} parent=1 // pred_fallthru
      _
    // Predicated region
    $region6: #{tpu_custom_call.1} parent=1 // pred_check
      _
    $region7: #{tpu_custom_call.1} parent=1 // pred_check_branch
      %29 = sbr.rel (0) target = $region9
    $region8: #{tpu_custom_call.1} parent=1 // pred_region
      %s31 = ssub.s32 2048, 2048
      %32 = vsyncadd [#allocation9], %s31
      %s33 = sshll.u32 [#allocation8], 4
      %s34 = int_to_ptr.vmem [resolvable:$true] %s33
      %39 = dma.hbm_to_vmem [thread:$0]  %s1, 2048, %s34, [#allocation9], 128, 128, 8
    $region9: #{tpu_custom_call.1} parent=1 // pred_fallthru
      _
    // Predicated region
    $region10: #{tpu_custom_call.1} parent=1 // pred_check
      _
    $region11: #{tpu_custom_call.1} parent=1 // pred_check_branch
      %41 = sbr.rel (0) target = $region13
    $region12: #{tpu_custom_call.1} parent=1 // pred_region
      %s43 = ssub.s32 2048, 2048
      %44 = vsyncadd [#allocation9], %s43
      %s45 = sshll.u32 [#allocation10], 4
      %s46 = int_to_ptr.vmem [resolvable:$true] %s45
      %51 = dma.hbm_to_vmem [thread:$0]  %s2, 2048, %s46, [#allocation9], 128, 128, 8
    $region13: #{tpu_custom_call.1} parent=1 // pred_fallthru
      _
    // Predicated region
    $region14: #{tpu_custom_call.1} parent=1 // pred_check
      _
    $region15: #{tpu_custom_call.1} parent=1 // pred_check_branch
      %53 = sbr.rel (0) target = $region17
    $region16: #{tpu_custom_call.1} parent=1 // pred_region
      %p54 = scmp.eq.s32.totalorder 0, 0
      %s55 = scalar_select %p54, 0, 0
      %s56 = smul.u32 16, %s55
      %s58 = ssub.s32 2048, 2048
      %59 = vsyncadd [#allocation12], %s58
      %s60 = smul.addr %s56, 128
      %s61 = scalar_lea.hbm %s3, %s60
      %s62 = sshll.u32 [#allocation11], 4
      %s63 = int_to_ptr.vmem [resolvable:$true] %s62
      %68 = dma.hbm_to_vmem [thread:$0]  %s61, 2048, %s63, [#allocation12], 128, 128, 8
    $region17: #{tpu_custom_call.1} parent=1 // pred_fallthru
      _
    // Predicated region
    $region18: #{tpu_custom_call.1} parent=1 // pred_check
      _
    $region19: #{tpu_custom_call.1} parent=1 // pred_check_branch
      %70 = sbr.rel (0) target = $region21
    $region20: #{tpu_custom_call.1} parent=1 // pred_region
      _
    $region21: #{tpu_custom_call.1} parent=1 // pred_fallthru
      _
    // Predicated region
    $region22: #{tpu_custom_call.1} parent=1 // pred_check
      _
    $region23: #{tpu_custom_call.1} parent=1 // pred_check_branch
      %72 = sbr.rel (0) target = $region25
    $region24: #{tpu_custom_call.1} parent=1 // pred_region
      _
    $region25: #{tpu_custom_call.1} parent=1 // pred_fallthru
      _
    // Predicated region
    $region26: #{tpu_custom_call.1} parent=1 // pred_check
      _
    $region27: #{tpu_custom_call.1} parent=1 // pred_check_branch
      %74 = sbr.rel (0) target = $region29
    $region28: #{tpu_custom_call.1} parent=1 // pred_region
      %s76 = ssub.s32 2048, 2048
      %77 = vsyncadd [#allocation12], %s76
      %s78 = sshll.u32 [#allocation13], 4
      %s79 = int_to_ptr.vmem [resolvable:$true] %s78
      %84 = dma.hbm_to_vmem [thread:$0]  %s6, 2048, %s79, [#allocation12], 128, 128, 8
    $region29: #{tpu_custom_call.1} parent=1 // pred_fallthru
      _
    // Predicated region
    $region30: #{tpu_custom_call.1} parent=1 // pred_check
      _
    $region31: #{tpu_custom_call.1} parent=1 // pred_check_branch
      %86 = sbr.rel (0) target = $region33
    $region32: #{tpu_custom_call.1} parent=1 // pred_region
      %87 = dma.done [#allocation6], 256
    $region33: #{tpu_custom_call.1} parent=1 // pred_fallthru
      _
    // Predicated region
    $region34: #{tpu_custom_call.1} parent=1 // pred_check
      _
    $region35: #{tpu_custom_call.1} parent=1 // pred_check_branch
      %89 = sbr.rel (0) target = $region37
    $region36: #{tpu_custom_call.1} parent=1 // pred_region
      %90 = dma.done [#allocation9], 2048
    $region37: #{tpu_custom_call.1} parent=1 // pred_fallthru
      _
    // Predicated region
    $region38: #{tpu_custom_call.1} parent=1 // pred_check
      _
    $region39: #{tpu_custom_call.1} parent=1 // pred_check_branch
      %92 = sbr.rel (0) target = $region41
    $region40: #{tpu_custom_call.1} parent=1 // pred_region
      %93 = dma.done [#allocation9], 2048
    $region41: #{tpu_custom_call.1} parent=1 // pred_fallthru
      _
    // Predicated region
    $region42: #{tpu_custom_call.1} parent=1 // pred_check
      _
    $region43: #{tpu_custom_call.1} parent=1 // pred_check_branch
      %95 = sbr.rel (0) target = $region45
    $region44: #{tpu_custom_call.1} parent=1 // pred_region
      %96 = dma.done [#allocation12], 2048
    $region45: #{tpu_custom_call.1} parent=1 // pred_fallthru
      _
    // Predicated region
    $region46: #{tpu_custom_call.1} parent=1 // pred_check
      _
    $region47: #{tpu_custom_call.1} parent=1 // pred_check_branch
      %98 = sbr.rel (0) target = $region49
    $region48: #{tpu_custom_call.1} parent=1 // pred_region
      %99 = dma.done [#allocation12], 2048
    $region49: #{tpu_custom_call.1} parent=1 // pred_fallthru
      _
    %p100 = scmp.eq.s32.totalorder 0, 0
    %s101 = scalar_select %p100, 0, 0
    %s102 = smul.u32 16, %s101
    %p103 = scmp.eq.s32.totalorder 0, 0
    // Predicated region
    $region50: #{tpu_custom_call.1} parent=1 // pred_check
      %p104 = pneg %p103
    $region51: #{tpu_custom_call.1} parent=1 // pred_check_branch
      %106 = sbr.rel (%p104) target = $region53
    $region52: #{tpu_custom_call.1} parent=1 // pred_region
      %107 = vst [vmem:[#allocation2] sm:$0xff] 0.0
      %108 = vst [vmem:[#allocation2 + $0x8] sm:$0xff] 0.0
      %109 = vst [vmem:[#allocation3] sm:$0xff] 0.0
      %110 = vst [vmem:[#allocation3 + $0x8] sm:$0xff] 0.0
    $region53: #{tpu_custom_call.1} parent=1 // pred_fallthru
      _
    %p111 = scmp.eq.s32.totalorder 0, 0
    %p112 = pnand %p111, %p103
    %p113 = pneg %p112
    // Predicated region
    $region54: #{tpu_custom_call.1} parent=1 // pred_check
      _
    $region55: #{tpu_custom_call.1} parent=1 // pred_check_branch
      %115 = sbr.rel (%p112) target = $region57
    $region56: #{tpu_custom_call.1} parent=1 // pred_region
      %116 = vst [vmem:[#allocation4] sm:$0xff] 0.0
      %117 = vst [vmem:[#allocation4 + $0x8] sm:$0xff] 0.0
    $region57: #{tpu_custom_call.1} parent=1 // pred_fallthru
      _
    %v118 = vld [vmem:[#allocation5] sm:$0xff]
    %v119 = vld [vmem:[#allocation5 + $0x8] sm:$0xff]
    %v120 = vld [vmem:[#allocation2] sm:$0xff]
    %v121 = vld [vmem:[#allocation2 + $0x8] sm:$0xff]
    %v122 = vld [vmem:[#allocation8] sm:$0xff]
    %v123 = vld [vmem:[#allocation8 + $0x8] sm:$0xff]
    %v124 = vld [vmem:[#allocation8 + $0x10] sm:$0xff]
    %v125 = vld [vmem:[#allocation8 + $0x18] sm:$0xff]
    %v126 = vld [vmem:[#allocation8 + $0x20] sm:$0xff]
    %v127 = vld [vmem:[#allocation8 + $0x28] sm:$0xff]
    %v128 = vld [vmem:[#allocation8 + $0x30] sm:$0xff]
    %v129 = vld [vmem:[#allocation8 + $0x38] sm:$0xff]
    %v130 = vld [vmem:[#allocation8 + $0x40] sm:$0xff]
    %v131 = vld [vmem:[#allocation8 + $0x48] sm:$0xff]
    %v132 = vld [vmem:[#allocation8 + $0x50] sm:$0xff]
    %v133 = vld [vmem:[#allocation8 + $0x58] sm:$0xff]
    %v134 = vld [vmem:[#allocation8 + $0x60] sm:$0xff]
    %v135 = vld [vmem:[#allocation8 + $0x68] sm:$0xff]
    %v136 = vld [vmem:[#allocation8 + $0x70] sm:$0xff]
    %v137 = vld [vmem:[#allocation8 + $0x78] sm:$0xff]
    %138 = vmatprep.subr.mxu0 0.0
    %139 = vmatpush1.msra.mxu0 %v122
    %140 = vmatprep.subr.mxu0 0.0
    %141 = vmatpush1.msra.mxu0 %v123
    %142 = vmatprep.subr.mxu0 0.0
    %143 = vmatpush1.msra.mxu0 %v124
    %144 = vmatprep.subr.mxu0 0.0
    %145 = vmatpush1.msra.mxu0 %v125
    %146 = vmatprep.subr.mxu0 0.0
    %147 = vmatpush1.msra.mxu0 %v126
    %148 = vmatprep.subr.mxu0 0.0
    %149 = vmatpush1.msra.mxu0 %v127
    %150 = vmatprep.subr.mxu0 0.0
    %151 = vmatpush1.msra.mxu0 %v128
    %152 = vmatprep.subr.mxu0 0.0
    %153 = vmatpush1.msra.mxu0 %v129
    %154 = vmatprep.subr.mxu0 0.0
    %155 = vmatpush1.msra.mxu0 %v130
    %156 = vmatprep.subr.mxu0 0.0
    %157 = vmatpush1.msra.mxu0 %v131
    %158 = vmatprep.subr.mxu0 0.0
    %159 = vmatpush1.msra.mxu0 %v132
    %160 = vmatprep.subr.mxu0 0.0
    %161 = vmatpush1.msra.mxu0 %v133
    %162 = vmatprep.subr.mxu0 0.0
    %163 = vmatpush1.msra.mxu0 %v134
    %164 = vmatprep.subr.mxu0 0.0
    %165 = vmatpush1.msra.mxu0 %v135
    %166 = vmatprep.subr.mxu0 0.0
    %167 = vmatpush1.msra.mxu0 %v136
    %168 = vmatprep.subr.mxu0 0.0
    %169 = vmatpush1.msra.mxu0 %v137
    %170 = vmatprep.subr.mxu0 0.0
    %171 = vmatpush1.msra.mxu0 0.0
    %172 = vmatprep.subr.mxu0 0.0
    %173 = vmatpush1.msra.mxu0 0.0
    %174 = vmatprep.subr.mxu0 0.0
    %175 = vmatpush1.msra.mxu0 0.0
    %176 = vmatprep.subr.mxu0 0.0
    %177 = vmatpush1.msra.mxu0 0.0
    %178 = vmatprep.subr.mxu0 0.0
    %179 = vmatpush1.msra.mxu0 0.0
    %180 = vmatprep.subr.mxu0 0.0
    %181 = vmatpush1.msra.mxu0 0.0
    %182 = vmatprep.subr.mxu0 0.0
    %183 = vmatpush1.msra.mxu0 0.0
    %184 = vmatprep.subr.mxu0 0.0
    %185 = vmatpush1.msra.mxu0 0.0
    %186 = vmatprep.subr.mxu0 0.0
    %187 = vmatpush1.msra.mxu0 0.0
    %188 = vmatprep.subr.mxu0 0.0
    %189 = vmatpush1.msra.mxu0 0.0
    %190 = vmatprep.subr.mxu0 0.0
    %191 = vmatpush1.msra.mxu0 0.0
    %192 = vmatprep.subr.mxu0 0.0
    %193 = vmatpush1.msra.mxu0 0.0
    %194 = vmatprep.subr.mxu0 0.0
    %195 = vmatpush1.msra.mxu0 0.0
    %196 = vmatprep.subr.mxu0 0.0
    %197 = vmatpush1.msra.mxu0 0.0
    %198 = vmatprep.subr.mxu0 0.0
    %199 = vmatpush1.msra.mxu0 0.0
    %200 = vmatprep.subr.mxu0 0.0
    %201 = vmatpush1.msra.mxu0 0.0
    %202 = vmatprep.mubr.f32.mxu0 0.0
    %203 = vmatmul.mubr.f32.gmra.mrb[0].mxu0 %v118
    %v204 = vpop.f32.mrb[0].mxu0
    %v205 = vadd.f32 0.0, %v204
    %v206 = vpop.f32.mrb[0].mxu0
    %207 = vmatprep.mubr.f32.mxu0 0.0
    %208 = vmatmul.mubr.f32.gmra.mrb[0].mxu0 %v119
    %v209 = vpop.f32.mrb[0].mxu0
    %v210 = vadd.f32 0.0, %v209
    %v211 = vpop.f32.mrb[0].mxu0
    %212 = vdwg.mxu0
    %v213 = vadd.f32 %v120, %v205
    %v214 = vadd.f32 %v121, %v210
    %215 = vst [vmem:[#allocation2] sm:$0xff] %v213
    %216 = vst [vmem:[#allocation2 + $0x8] sm:$0xff] %v214
    %v217 = vld [vmem:[#allocation3] sm:$0xff]
    %v218 = vld [vmem:[#allocation3 + $0x8] sm:$0xff]
    %v219 = vld [vmem:[#allocation10] sm:$0xff]
    %v220 = vld [vmem:[#allocation10 + $0x8] sm:$0xff]
    %v221 = vld [vmem:[#allocation10 + $0x10] sm:$0xff]
    %v222 = vld [vmem:[#allocation10 + $0x18] sm:$0xff]
    %v223 = vld [vmem:[#allocation10 + $0x20] sm:$0xff]
    %v224 = vld [vmem:[#allocation10 + $0x28] sm:$0xff]
    %v225 = vld [vmem:[#allocation10 + $0x30] sm:$0xff]
    %v226 = vld [vmem:[#allocation10 + $0x38] sm:$0xff]
    %v227 = vld [vmem:[#allocation10 + $0x40] sm:$0xff]
    %v228 = vld [vmem:[#allocation10 + $0x48] sm:$0xff]
    %v229 = vld [vmem:[#allocation10 + $0x50] sm:$0xff]
    %v230 = vld [vmem:[#allocation10 + $0x58] sm:$0xff]
    %v231 = vld [vmem:[#allocation10 + $0x60] sm:$0xff]
    %v232 = vld [vmem:[#allocation10 + $0x68] sm:$0xff]
    %v233 = vld [vmem:[#allocation10 + $0x70] sm:$0xff]
    %v234 = vld [vmem:[#allocation10 + $0x78] sm:$0xff]
    %235 = vmatprep.subr.mxu0 0.0
    %236 = vmatpush1.msra.mxu0 %v219
    %237 = vmatprep.subr.mxu0 0.0
    %238 = vmatpush1.msra.mxu0 %v220
    %239 = vmatprep.subr.mxu0 0.0
    %240 = vmatpush1.msra.mxu0 %v221
    %241 = vmatprep.subr.mxu0 0.0
    %242 = vmatpush1.msra.mxu0 %v222
    %243 = vmatprep.subr.mxu0 0.0
    %244 = vmatpush1.msra.mxu0 %v223
    %245 = vmatprep.subr.mxu0 0.0
    %246 = vmatpush1.msra.mxu0 %v224
    %247 = vmatprep.subr.mxu0 0.0
    %248 = vmatpush1.msra.mxu0 %v225
    %249 = vmatprep.subr.mxu0 0.0
    %250 = vmatpush1.msra.mxu0 %v226
    %251 = vmatprep.subr.mxu0 0.0
    %252 = vmatpush1.msra.mxu0 %v227
    %253 = vmatprep.subr.mxu0 0.0
    %254 = vmatpush1.msra.mxu0 %v228
    %255 = vmatprep.subr.mxu0 0.0
    %256 = vmatpush1.msra.mxu0 %v229
    %257 = vmatprep.subr.mxu0 0.0
    %258 = vmatpush1.msra.mxu0 %v230
    %259 = vmatprep.subr.mxu0 0.0
    %260 = vmatpush1.msra.mxu0 %v231
    %261 = vmatprep.subr.mxu0 0.0
    %262 = vmatpush1.msra.mxu0 %v232
    %263 = vmatprep.subr.mxu0 0.0
    %264 = vmatpush1.msra.mxu0 %v233
    %265 = vmatprep.subr.mxu0 0.0
    %266 = vmatpush1.msra.mxu0 %v234
    %267 = vmatprep.subr.mxu0 0.0
    %268 = vmatpush1.msra.mxu0 0.0
    %269 = vmatprep.subr.mxu0 0.0
    %270 = vmatpush1.msra.mxu0 0.0
    %271 = vmatprep.subr.mxu0 0.0
    %272 = vmatpush1.msra.mxu0 0.0
    %273 = vmatprep.subr.mxu0 0.0
    %274 = vmatpush1.msra.mxu0 0.0
    %275 = vmatprep.subr.mxu0 0.0
    %276 = vmatpush1.msra.mxu0 0.0
    %277 = vmatprep.subr.mxu0 0.0
    %278 = vmatpush1.msra.mxu0 0.0
    %279 = vmatprep.subr.mxu0 0.0
    %280 = vmatpush1.msra.mxu0 0.0
    %281 = vmatprep.subr.mxu0 0.0
    %282 = vmatpush1.msra.mxu0 0.0
    %283 = vmatprep.subr.mxu0 0.0
    %284 = vmatpush1.msra.mxu0 0.0
    %285 = vmatprep.subr.mxu0 0.0
    %286 = vmatpush1.msra.mxu0 0.0
    %287 = vmatprep.subr.mxu0 0.0
    %288 = vmatpush1.msra.mxu0 0.0
    %289 = vmatprep.subr.mxu0 0.0
    %290 = vmatpush1.msra.mxu0 0.0
    %291 = vmatprep.subr.mxu0 0.0
    %292 = vmatpush1.msra.mxu0 0.0
    %293 = vmatprep.subr.mxu0 0.0
    %294 = vmatpush1.msra.mxu0 0.0
    %295 = vmatprep.subr.mxu0 0.0
    %296 = vmatpush1.msra.mxu0 0.0
    %297 = vmatprep.subr.mxu0 0.0
    %298 = vmatpush1.msra.mxu0 0.0
    %299 = vmatprep.mubr.f32.mxu0 0.0
    %300 = vmatmul.mubr.f32.gmra.mrb[0].mxu0 %v118
    %v301 = vpop.f32.mrb[0].mxu0
    %v302 = vadd.f32 0.0, %v301
    %v303 = vpop.f32.mrb[0].mxu0
    %304 = vmatprep.mubr.f32.mxu0 0.0
    %305 = vmatmul.mubr.f32.gmra.mrb[0].mxu0 %v119
    %v306 = vpop.f32.mrb[0].mxu0
    %v307 = vadd.f32 0.0, %v306
    %v308 = vpop.f32.mrb[0].mxu0
    %309 = vdwg.mxu0
    %v310 = vadd.f32 %v217, %v302
    %v311 = vadd.f32 %v218, %v307
    %312 = vst [vmem:[#allocation3] sm:$0xff] %v310
    %313 = vst [vmem:[#allocation3 + $0x8] sm:$0xff] %v311
    // Predicated region
    $region58: #{tpu_custom_call.1} parent=1 // pred_check
      %p314 = pneg %p111
    $region59: #{tpu_custom_call.1} parent=1 // pred_check_branch
      %316 = sbr.rel (%p314) target = $region61
    $region60: #{tpu_custom_call.1} parent=1 // pred_region
      %v317 = vld [vmem:[#allocation4] sm:$0xff]
      %v318 = vld [vmem:[#allocation4 + $0x8] sm:$0xff]
      %v319 = vld [vmem:[#allocation11] sm:$0xff]
      %v320 = vld [vmem:[#allocation11 + $0x8] sm:$0xff]
      %v321 = vld [vmem:[#allocation11 + $0x10] sm:$0xff]
      %v322 = vld [vmem:[#allocation11 + $0x18] sm:$0xff]
      %v323 = vld [vmem:[#allocation11 + $0x20] sm:$0xff]
      %v324 = vld [vmem:[#allocation11 + $0x28] sm:$0xff]
      %v325 = vld [vmem:[#allocation11 + $0x30] sm:$0xff]
      %v326 = vld [vmem:[#allocation11 + $0x38] sm:$0xff]
      %v327 = vld [vmem:[#allocation11 + $0x40] sm:$0xff]
      %v328 = vld [vmem:[#allocation11 + $0x48] sm:$0xff]
      %v329 = vld [vmem:[#allocation11 + $0x50] sm:$0xff]
      %v330 = vld [vmem:[#allocation11 + $0x58] sm:$0xff]
      %v331 = vld [vmem:[#allocation11 + $0x60] sm:$0xff]
      %v332 = vld [vmem:[#allocation11 + $0x68] sm:$0xff]
      %v333 = vld [vmem:[#allocation11 + $0x70] sm:$0xff]
      %v334 = vld [vmem:[#allocation11 + $0x78] sm:$0xff]
      %335 = vmatprep.subr.mxu0 0.0
      %336 = vmatpush1.msra.mxu0 %v319
      %337 = vmatprep.subr.mxu0 0.0
      %338 = vmatpush1.msra.mxu0 %v320
      %339 = vmatprep.subr.mxu0 0.0
      %340 = vmatpush1.msra.mxu0 %v321
      %341 = vmatprep.subr.mxu0 0.0
      %342 = vmatpush1.msra.mxu0 %v322
      %343 = vmatprep.subr.mxu0 0.0
      %344 = vmatpush1.msra.mxu0 %v323
      %345 = vmatprep.subr.mxu0 0.0
      %346 = vmatpush1.msra.mxu0 %v324
      %347 = vmatprep.subr.mxu0 0.0
      %348 = vmatpush1.msra.mxu0 %v325
      %349 = vmatprep.subr.mxu0 0.0
      %350 = vmatpush1.msra.mxu0 %v326
      %351 = vmatprep.subr.mxu0 0.0
      %352 = vmatpush1.msra.mxu0 %v327
      %353 = vmatprep.subr.mxu0 0.0
      %354 = vmatpush1.msra.mxu0 %v328
      %355 = vmatprep.subr.mxu0 0.0
      %356 = vmatpush1.msra.mxu0 %v329
      %357 = vmatprep.subr.mxu0 0.0
      %358 = vmatpush1.msra.mxu0 %v330
      %359 = vmatprep.subr.mxu0 0.0
      %360 = vmatpush1.msra.mxu0 %v331
      %361 = vmatprep.subr.mxu0 0.0
      %362 = vmatpush1.msra.mxu0 %v332
      %363 = vmatprep.subr.mxu0 0.0
      %364 = vmatpush1.msra.mxu0 %v333
      %365 = vmatprep.subr.mxu0 0.0
      %366 = vmatpush1.msra.mxu0 %v334
      %367 = vmatprep.subr.mxu0 0.0
      %368 = vmatpush1.msra.mxu0 0.0
      %369 = vmatprep.subr.mxu0 0.0
      %370 = vmatpush1.msra.mxu0 0.0
      %371 = vmatprep.subr.mxu0 0.0
      %372 = vmatpush1.msra.mxu0 0.0
      %373 = vmatprep.subr.mxu0 0.0
      %374 = vmatpush1.msra.mxu0 0.0
      %375 = vmatprep.subr.mxu0 0.0
      %376 = vmatpush1.msra.mxu0 0.0
      %377 = vmatprep.subr.mxu0 0.0
      %378 = vmatpush1.msra.mxu0 0.0
      %379 = vmatprep.subr.mxu0 0.0
      %380 = vmatpush1.msra.mxu0 0.0
      %381 = vmatprep.subr.mxu0 0.0
      %382 = vmatpush1.msra.mxu0 0.0
      %383 = vmatprep.subr.mxu0 0.0
      %384 = vmatpush1.msra.mxu0 0.0
      %385 = vmatprep.subr.mxu0 0.0
      %386 = vmatpush1.msra.mxu0 0.0
      %387 = vmatprep.subr.mxu0 0.0
      %388 = vmatpush1.msra.mxu0 0.0
      %389 = vmatprep.subr.mxu0 0.0
      %390 = vmatpush1.msra.mxu0 0.0
      %391 = vmatprep.subr.mxu0 0.0
      %392 = vmatpush1.msra.mxu0 0.0
      %393 = vmatprep.subr.mxu0 0.0
      %394 = vmatpush1.msra.mxu0 0.0
      %395 = vmatprep.subr.mxu0 0.0
      %396 = vmatpush1.msra.mxu0 0.0
      %397 = vmatprep.subr.mxu0 0.0
      %398 = vmatpush1.msra.mxu0 0.0
      %399 = vmatprep.mubr.f32.mxu0 0.0
      %400 = vmatmul.mubr.f32.gmra.mrb[0].mxu0 %v118
      %v401 = vpop.f32.mrb[0].mxu0
      %v402 = vadd.f32 0.0, %v401
      %v403 = vpop.f32.mrb[0].mxu0
      %404 = vmatprep.mubr.f32.mxu0 0.0
      %405 = vmatmul.mubr.f32.gmra.mrb[0].mxu0 %v119
      %v406 = vpop.f32.mrb[0].mxu0
      %v407 = vadd.f32 0.0, %v406
      %v408 = vpop.f32.mrb[0].mxu0
      %409 = vdwg.mxu0
      %v410 = vadd.f32 %v317, %v402
      %v411 = vadd.f32 %v318, %v407
      %412 = vst [vmem:[#allocation4] sm:$0xff] %v410
      %413 = vst [vmem:[#allocation4 + $0x8] sm:$0xff] %v411
    $region61: #{tpu_custom_call.1} parent=1 // pred_fallthru
      _
    // Predicated region
    $region62: #{tpu_custom_call.1} parent=1 // pred_check
      %p414 = pneg %p103
    $region63: #{tpu_custom_call.1} parent=1 // pred_check_branch
      %416 = sbr.rel (%p414) target = $region65
    $region64: #{tpu_custom_call.1} parent=1 // pred_region
      %v417 = vld [vmem:[#allocation2] sm:$0xff]
      %v418 = vld [vmem:[#allocation2 + $0x8] sm:$0xff]
      %v419 = vld [vmem:[%s4] sm:$0x1]
      %v421 = vlaneseq
      %v422 = vshrl.u32 %v421, 7
      %v423 = vsub.s32 0, %v422
      %v424 = vrot.slane %v419, %v423
      %v426 = vadd.f32 %v417, %v424
      %v427 = vadd.f32 %v418, %v424
      %v428 = vld [vmem:[#allocation4] sm:$0xff]
      %v429 = vld [vmem:[#allocation4 + $0x8] sm:$0xff]
      %v430 = vld [vmem:[#allocation13] sm:$0xff]
      %v431 = vld [vmem:[#allocation13 + $0x8] sm:$0xff]
      %v432 = vld [vmem:[#allocation13 + $0x10] sm:$0xff]
      %v433 = vld [vmem:[#allocation13 + $0x18] sm:$0xff]
      %v434 = vld [vmem:[#allocation13 + $0x20] sm:$0xff]
      %v435 = vld [vmem:[#allocation13 + $0x28] sm:$0xff]
      %v436 = vld [vmem:[#allocation13 + $0x30] sm:$0xff]
      %v437 = vld [vmem:[#allocation13 + $0x38] sm:$0xff]
      %v438 = vld [vmem:[#allocation13 + $0x40] sm:$0xff]
      %v439 = vld [vmem:[#allocation13 + $0x48] sm:$0xff]
      %v440 = vld [vmem:[#allocation13 + $0x50] sm:$0xff]
      %v441 = vld [vmem:[#allocation13 + $0x58] sm:$0xff]
      %v442 = vld [vmem:[#allocation13 + $0x60] sm:$0xff]
      %v443 = vld [vmem:[#allocation13 + $0x68] sm:$0xff]
      %v444 = vld [vmem:[#allocation13 + $0x70] sm:$0xff]
      %v445 = vld [vmem:[#allocation13 + $0x78] sm:$0xff]
      %446 = vmatprep.subr.mxu0 0.0
      %447 = vmatpush1.msra.mxu0 %v430
      %448 = vmatprep.subr.mxu0 0.0
      %449 = vmatpush1.msra.mxu0 %v431
      %450 = vmatprep.subr.mxu0 0.0
      %451 = vmatpush1.msra.mxu0 %v432
      %452 = vmatprep.subr.mxu0 0.0
      %453 = vmatpush1.msra.mxu0 %v433
      %454 = vmatprep.subr.mxu0 0.0
      %455 = vmatpush1.msra.mxu0 %v434
      %456 = vmatprep.subr.mxu0 0.0
      %457 = vmatpush1.msra.mxu0 %v435
      %458 = vmatprep.subr.mxu0 0.0
      %459 = vmatpush1.msra.mxu0 %v436
      %460 = vmatprep.subr.mxu0 0.0
      %461 = vmatpush1.msra.mxu0 %v437
      %462 = vmatprep.subr.mxu0 0.0
      %463 = vmatpush1.msra.mxu0 %v438
      %464 = vmatprep.subr.mxu0 0.0
      %465 = vmatpush1.msra.mxu0 %v439
      %466 = vmatprep.subr.mxu0 0.0
      %467 = vmatpush1.msra.mxu0 %v440
      %468 = vmatprep.subr.mxu0 0.0
      %469 = vmatpush1.msra.mxu0 %v441
      %470 = vmatprep.subr.mxu0 0.0
      %471 = vmatpush1.msra.mxu0 %v442
      %472 = vmatprep.subr.mxu0 0.0
      %473 = vmatpush1.msra.mxu0 %v443
      %474 = vmatprep.subr.mxu0 0.0
      %475 = vmatpush1.msra.mxu0 %v444
      %476 = vmatprep.subr.mxu0 0.0
      %477 = vmatpush1.msra.mxu0 %v445
      %478 = vmatprep.subr.mxu0 0.0
      %479 = vmatpush1.msra.mxu0 0.0
      %480 = vmatprep.subr.mxu0 0.0
      %481 = vmatpush1.msra.mxu0 0.0
      %482 = vmatprep.subr.mxu0 0.0
      %483 = vmatpush1.msra.mxu0 0.0
      %484 = vmatprep.subr.mxu0 0.0
      %485 = vmatpush1.msra.mxu0 0.0
      %486 = vmatprep.subr.mxu0 0.0
      %487 = vmatpush1.msra.mxu0 0.0
      %488 = vmatprep.subr.mxu0 0.0
      %489 = vmatpush1.msra.mxu0 0.0
      %490 = vmatprep.subr.mxu0 0.0
      %491 = vmatpush1.msra.mxu0 0.0
      %492 = vmatprep.subr.mxu0 0.0
      %493 = vmatpush1.msra.mxu0 0.0
      %494 = vmatprep.subr.mxu0 0.0
      %495 = vmatpush1.msra.mxu0 0.0
      %496 = vmatprep.subr.mxu0 0.0
      %497 = vmatpush1.msra.mxu0 0.0
      %498 = vmatprep.subr.mxu0 0.0
      %499 = vmatpush1.msra.mxu0 0.0
      %500 = vmatprep.subr.mxu0 0.0
      %501 = vmatpush1.msra.mxu0 0.0
      %502 = vmatprep.subr.mxu0 0.0
      %503 = vmatpush1.msra.mxu0 0.0
      %504 = vmatprep.subr.mxu0 0.0
      %505 = vmatpush1.msra.mxu0 0.0
      %506 = vmatprep.subr.mxu0 0.0
      %507 = vmatpush1.msra.mxu0 0.0
      %508 = vmatprep.subr.mxu0 0.0
      %509 = vmatpush1.msra.mxu0 0.0
      %510 = vmatprep.mubr.f32.mxu0 0.0
      %511 = vmatmul.mubr.f32.gmra.mrb[0].mxu0 %v428
      %v512 = vpop.f32.mrb[0].mxu0
      %v513 = vadd.f32 0.0, %v512
      %v514 = vpop.f32.mrb[0].mxu0
      %515 = vmatprep.mubr.f32.mxu0 0.0
      %516 = vmatmul.mubr.f32.gmra.mrb[0].mxu0 %v429
      %v517 = vpop.f32.mrb[0].mxu0
      %v518 = vadd.f32 0.0, %v517
      %v519 = vpop.f32.mrb[0].mxu0
      %520 = vdwg.mxu0
      %v521 = vld [vmem:[#allocation3] sm:$0xff]
      %v522 = vld [vmem:[#allocation3 + $0x8] sm:$0xff]
      %v523 = vld [vmem:[%s5] sm:$0x1]
      %v525 = vlaneseq
      %v526 = vshrl.u32 %v525, 7
      %v527 = vsub.s32 0, %v526
      %v528 = vrot.slane %v523, %v527
      %v530 = vadd.f32 %v521, %v528
      %v531 = vadd.f32 %v522, %v528
      %v532 = vxor.u32 %v530, 2147483648
      %v533 = vxor.u32 %v531, 2147483648
      %v534 = vmul.f32 %v532, 1.442695
      %v535 = vpow.pop %v534
      %v536 = vmul.f32 %v533, 1.442695
      %v537 = vpow.pop %v536
      %v538 = vadd.f32 %v535, 1.0
      %v539 = vadd.f32 %v537, 1.0
      %v540 = vrcp.pop %v538
      %v541 = vmul.f32 1.0, %v540
      %v542 = vrcp.pop %v539
      %v543 = vmul.f32 1.0, %v542
      %v544 = vmul.f32 %v513, %v541
      %v545 = vmul.f32 %v518, %v543
      %v546 = vadd.f32 %v426, %v544
      %v547 = vadd.f32 %v427, %v545
      %548 = vst [vmem:[#allocation14] sm:$0xff] %v546
      %549 = vst [vmem:[#allocation14 + $0x8] sm:$0xff] %v547
    $region65: #{tpu_custom_call.1} parent=1 // pred_fallthru
      _
    // Predicated region
    $region66: #{tpu_custom_call.1} parent=1 // pred_check
      _
    $region67: #{tpu_custom_call.1} parent=1 // pred_check_branch
      %551 = sbr.rel (0) target = $region69
    $region68: #{tpu_custom_call.1} parent=1 // pred_region
      %s553 = ssub.s32 256, 256
      %554 = vsyncadd [#allocation7], %s553
      %s555 = sshll.u32 [#allocation14], 4
      %s556 = int_to_ptr.vmem [resolvable:$true] %s555
      %561 = dma.vmem_to_hbm [thread:$0]  %s556, 256, %s7, [#allocation7], 128, 128, 8
    $region69: #{tpu_custom_call.1} parent=1 // pred_fallthru
      _
    // Predicated region
    $region70: #{tpu_custom_call.1} parent=1 // pred_check
      _
    $region71: #{tpu_custom_call.1} parent=1 // pred_check_branch
      %563 = sbr.rel (0) target = $region73
    $region72: #{tpu_custom_call.1} parent=1 // pred_region
      %564 = dma.done [#allocation7], 256
    $region73: #{tpu_custom_call.1} parent=1 // pred_fallthru
      _
    %565 = vsyncpa [#allocation6], 1
    %566 = vsyncpa [#allocation9], 1
    %567 = vsyncpa [#allocation12], 1
    %568 = vsyncpa [#allocation7], 1

</llo_original>
